<compile_context>
chip_gen: v7x
topology: tpu7x:2x2x1
jax: 0.10.0
libtpu: 0.0.40
codegen_flags: <defaults>
</compile_context>

<pallas_src>
import functools

import jax
import jax.numpy as jnp
from jax.experimental import pallas as pl
from jax.experimental.pallas import tpu as pltpu


# ----------------------------- in-kernel helpers ---------------------------
def _corr_full(x_slab, w_stacked, k):
    """Full-slab correlation: (C, Lt) x (Cout, k*C) -> (Cout, Lt-k+1) in f32.

    Samples are packed along the lane axis with per-sample zero padding; the
    caller simply never reads the output lanes that straddle two samples.
    w_stacked column j*C + ci holds tap j, input channel ci.
    """
    c, lt = x_slab.shape
    m = lt - k + 1
    if c % 8 == 0:
        # Sublane-tile aligned: one im2col stack -> a single MXU matmul with
        # contraction k*C (bf16 operands, f32 accumulate).
        im = jnp.concatenate([x_slab[:, j:j + m] for j in range(k)], axis=0)
        return jnp.dot(w_stacked, im, preferred_element_type=jnp.float32)
    # Channel count not sublane-aligned: fall back to k tap matmuls (the tap
    # slices are cheap lane shifts).
    acc = jnp.dot(w_stacked[:, 0:c], x_slab[:, 0:m],
                  preferred_element_type=jnp.float32)
    for j in range(1, k):
        acc = acc + jnp.dot(w_stacked[:, j * c:(j + 1) * c],
                            x_slab[:, j:j + m],
                            preferred_element_type=jnp.float32)
    return acc


# ------------------------------- fused kernel ------------------------------
def _up_fused_kernel(x1_ref, x2_ref, w1_ref, w2_ref, b1_ref, b2_ref, o_ref,
                     buf1_ref, buf2_ref, *, k, p):
    bt, in_ch, l1 = x1_ref.shape
    c2, l2 = x2_ref.shape[1], x2_ref.shape[2]
    pad1 = k - 1 - p                      # deconv-as-correlation padding
    lp1 = l1 + 2 * pad1                   # per-sample padded deconv length
    l_up = lp1 - (k - 1)                  # ConvTranspose1d output length
    lp2 = l2 + 2 * p                      # per-sample padded concat length
    l_out = lp2 - (k - 1)                 # final conv output length
    left = (l2 - l_up) // 2               # F.pad left amount

    # Pre-zeroed padded slabs: padding / F.pad / channel concat all become
    # static-offset payload writes (no concatenate-pad copies).
    buf1_ref[...] = jnp.zeros_like(buf1_ref)
    buf2_ref[...] = jnp.zeros_like(buf2_ref)
    for b in range(bt):
        buf1_ref[:, b * lp1 + pad1: b * lp1 + pad1 + l1] = x1_ref[b]
        buf2_ref[0:c2, b * lp2 + p: b * lp2 + p + l2] = x2_ref[b]

    # ---- upsample: ConvTranspose1d(stride=1) == correlation with the
    #      tap-flipped kernel on the (k-1-p)-padded input.  One bf16 MXU
    #      matmul covers the whole batch tile; bias + ReLU in f32.
    y1 = _corr_full(buf1_ref[...], w1_ref[...], k)      # (out_ch, bt*lp1-k+1)
    y1 = jnp.maximum(y1 + b1_ref[...], 0.0).astype(buf2_ref.dtype)

    # Place the upsampled samples into rows [c2:] of the concat slab at the
    # F.pad offset; the cross-sample lanes of y1 are never read.
    for b in range(bt):
        buf2_ref[c2:in_ch, b * lp2 + p + left: b * lp2 + p + left + l_up] = (
            y1[:, b * lp1: b * lp1 + l_up])

    # ---- second conv: single UN-split matmul, contraction k*in_ch.
    y2 = _corr_full(buf2_ref[...], w2_ref[...], k)      # (out_ch, bt*lp2-k+1)
    y2 = jnp.maximum(y2 + b2_ref[...], 0.0)

    # One lane-dense store of the whole batch tile.
    out = jnp.concatenate(
        [y2[:, b * lp2: b * lp2 + l_out] for b in range(bt)], axis=1)
    o_ref[...] = out.astype(o_ref.dtype)


# ------------------------------- host wrapper ------------------------------
def _pick_batch_tile(n, l_out, target_lanes=512):
    """Smallest divisor of n giving a lane-aligned (%128) output block of at
    least `target_lanes` lanes; falls back to the whole batch (a block equal
    to the full array is always legal)."""
    for d in range(1, n + 1):
        if n % d == 0 and d * l_out >= target_lanes and (d * l_out) % 128 == 0:
            return d
    return n


def up_fused(x1_ncl, x2_ncl, w1s, w2s, b1, b2, *, k, p, batch_tile=None):
    n, in_ch, l1 = x1_ncl.shape
    n2, c2, l2 = x2_ncl.shape
    out_ch = b1.shape[0]
    assert n2 == n and c2 + out_ch == in_ch
    assert k - 1 - p >= 0, "requires padding <= kernel_size - 1"
    l_up = l1 + k - 1 - 2 * p
    assert l2 >= l_up, "skip connection must be at least as long as upsampled path"
    l_out = l2 + 2 * p - k + 1
    assert w1s.shape == (out_ch, k * in_ch) and w2s.shape == (out_ch, k * in_ch)

    bt = batch_tile if batch_tile is not None else _pick_batch_tile(n, l_out)
    assert n % bt == 0 and (bt == n or (bt * l_out) % 128 == 0)

    pad1 = k - 1 - p
    lp1 = l1 + 2 * pad1
    lp2 = l2 + 2 * p

    # bf16 activations at the HBM boundary; the MXU consumes bf16 operands and
    # accumulates in f32.  (Weights are packed/cast once at module init.)
    x1_bf = x1_ncl.astype(jnp.bfloat16)
    x2_bf = x2_ncl.astype(jnp.bfloat16)

    kernel = functools.partial(_up_fused_kernel, k=k, p=p)
    out_slab = pl.pallas_call(
        kernel,
        out_shape=jax.ShapeDtypeStruct((out_ch, n * l_out), jnp.float32),
        grid_spec=pltpu.PrefetchScalarGridSpec(
            num_scalar_prefetch=0,
            grid=(n // bt,),
            in_specs=[
                pl.BlockSpec((bt, in_ch, l1), lambda i: (i, 0, 0)),
                pl.BlockSpec((bt, c2, l2), lambda i: (i, 0, 0)),
                # Constant index maps: weights/biases are DMA'd once and reused.
                # TODO(synk): pipeline_mode=pl.Buffered(1) would drop their
                # second pipeline buffer; skipped to keep lowering simple.
                pl.BlockSpec(w1s.shape, lambda i: (0, 0)),
                pl.BlockSpec(w2s.shape, lambda i: (0, 0)),
                pl.BlockSpec(b1.shape, lambda i: (0, 0)),
                pl.BlockSpec(b2.shape, lambda i: (0, 0)),
            ],
            out_specs=pl.BlockSpec((out_ch, bt * l_out), lambda i: (0, i)),
            scratch_shapes=[
                pltpu.VMEM((in_ch, bt * lp1), jnp.bfloat16),  # padded x1 slab
                pltpu.VMEM((in_ch, bt * lp2), jnp.bfloat16),  # padded concat slab
            ],
        ),
        compiler_params=pltpu.CompilerParams(
            dimension_semantics=("parallel",)),   # batch tiles split across TCs
    )(x1_bf, x2_bf, w1s, w2s, b1, b2)

    # (out_ch, N*l_out) lane-dense slab -> NCL; wrapper-side layout plumbing.
    y = jnp.transpose(out_slab.reshape(out_ch, n, l_out), (1, 0, 2))
    return y.astype(x1_ncl.dtype)


# --------------------------------- module ----------------------------------
class UpPallas:
    def __init__(self, in_ch, out_ch, kernel_size, stride=1, padding=1, key=None):
        # TODO(synk): stride > 1 ConvTranspose1d (zero-insertion upsampling) is
        # not implemented; the module's default stride=1 is what this covers.
        assert stride == 1, "kernel implements stride=1 (module default)"
        self.in_ch, self.out_ch, self.k, self.p = in_ch, out_ch, kernel_size, padding
        k1, k2 = jax.random.split(key)
        # ConvTranspose1d weight: (in_ch, out_ch, K); kaiming_normal_ (relu)
        fan_in_t = out_ch * kernel_size
        self.w_deconv = (2.0 / fan_in_t) ** 0.5 * jax.random.normal(
            k1, (in_ch, out_ch, kernel_size), jnp.float32)
        self.b_deconv = jnp.zeros((out_ch,), jnp.float32)
        # Conv1d weight: (out_ch, in_ch, K); kaiming_normal_ (relu)
        fan_in_c = in_ch * kernel_size
        self.w_conv = (2.0 / fan_in_c) ** 0.5 * jax.random.normal(
            k2, (out_ch, in_ch, kernel_size), jnp.float32)
        self.b_conv = jnp.zeros((out_ch,), jnp.float32)

        # ---- kernel-side packed weights (tiny, host-side, done once) ----
        kk = kernel_size
        # Deconv as correlation: w_eq[co, ci, j] = w_deconv[ci, co, kk-1-j].
        w_eq = jnp.transpose(self.w_deconv, (1, 0, 2))[:, :, ::-1]
        self.w1s = jnp.transpose(w_eq, (0, 2, 1)).reshape(
            out_ch, kk * in_ch).astype(jnp.bfloat16)
        # Second conv kept UN-split: column j*in_ch + ci is tap j of concat
        # channel ci (first in_ch-out_ch channels are x2, the rest x1u).
        self.w2s = jnp.transpose(self.w_conv, (0, 2, 1)).reshape(
            out_ch, kk * in_ch).astype(jnp.bfloat16)
        self.b1 = self.b_deconv.reshape(out_ch, 1)   # f32 epilogue
        self.b2 = self.b_conv.reshape(out_ch, 1)

    def __call__(self, x1_ncl, x2_ncl):
        return up_fused(x1_ncl, x2_ncl, self.w1s, self.w2s, self.b1, self.b2,
                        k=self.k, p=self.p)


# ----------------------- pure-JAX reference (XLA conv) ----------------------
def ref_up(m, x1_ncl, x2_ncl):
    """Reference emulating the kernel's numerics: bf16 MXU operands, f32
    accumulation, bf16 round of the ReLU'd intermediate."""
    bf = lambda a: a.astype(jnp.bfloat16).astype(jnp.float32)
    k, p = m.k, m.p
    hp = jax.lax.Precision.HIGHEST
    w_d = bf(jnp.transpose(m.w_deconv, (1, 0, 2))[:, :, ::-1])   # (out,in,K) flipped
    x1f, x2f = bf(x1_ncl), bf(x2_ncl)
    dn1 = jax.lax.conv_dimension_numbers(x1f.shape, w_d.shape, ('NCH', 'OIH', 'NCH'))
    x1u = jax.lax.conv_general_dilated(x1f, w_d, (1,), [(k - 1 - p, k - 1 - p)],
                                       dimension_numbers=dn1, precision=hp)
    x1u = jnp.maximum(x1u + m.b_deconv[None, :, None], 0.0)
    x1u = bf(x1u)    # kernel feeds the ReLU'd intermediate to the MXU in bf16
    diff = x2_ncl.shape[2] - x1u.shape[2]
    x1u = jnp.pad(x1u, ((0, 0), (0, 0), (diff // 2, diff - diff // 2)))
    xcat = jnp.concatenate([x2f, x1u], axis=1)
    w_c = bf(m.w_conv)
    dn2 = jax.lax.conv_dimension_numbers(xcat.shape, w_c.shape, ('NCH', 'OIH', 'NCH'))
    y = jax.lax.conv_general_dilated(xcat, w_c, (1,), [(p, p)],
                                     dimension_numbers=dn2, precision=hp)
    return jnp.maximum(y + m.b_conv[None, :, None], 0.0)


if __name__ == "__main__":
    key = jax.random.PRNGKey(0)
    kx1, kx2, kp = jax.random.split(key, 3)
    in_ch, out_ch, ksz = 8, 4, 3
    N, L1, L2 = 2, 14, 16
    # x1: decoder feature (in_ch channels); x2: skip connection (in_ch - out_ch
    # channels) so cat([x2, upsample(x1)]) has in_ch channels, as the conv expects.
    x1 = jax.random.normal(kx1, (N, in_ch, L1), jnp.float32)
    x2 = jax.random.normal(kx2, (N, in_ch - out_ch, L2), jnp.float32)

    model = UpPallas(in_ch, out_ch, ksz, stride=1, padding=1, key=kp)
    y = jax.block_until_ready(model(x1, x2))

    y_ref = ref_up(model, x1, x2)
    assert y.shape == (N, out_ch, L2), y.shape
    max_err = float(jnp.max(jnp.abs(y - y_ref)))
    assert jnp.allclose(y, y_ref, atol=2e-2, rtol=2e-2), max_err
    print("KERNEL_OK")
</pallas_src>

<mosaic_0001>
module attributes {stable_mosaic.version = 11 : i64} {
  func.func @_up_fused_kernel(%arg0: i32, %arg1: memref<2x8x14xbf16, #tpu.memory_space<vmem>>, %arg2: memref<2x4x16xbf16, #tpu.memory_space<vmem>>, %arg3: memref<4x24xbf16, #tpu.memory_space<vmem>>, %arg4: memref<4x24xbf16, #tpu.memory_space<vmem>>, %arg5: memref<4x1xf32, #tpu.memory_space<vmem>>, %arg6: memref<4x1xf32, #tpu.memory_space<vmem>>, %arg7: memref<4x32xf32, #tpu.memory_space<vmem>>, %arg8: memref<8x32xbf16, #tpu.memory_space<vmem>>, %arg9: memref<8x36xbf16, #tpu.memory_space<vmem>>) attributes {dimension_semantics = [#tpu.dimension_semantics<parallel>], iteration_bounds = array<i64: 1>, scalar_prefetch = 0 : i64, scratch_operands = 2 : i64, tpu.core_type = #tpu.core_type<tc>, window_params = [{transform_indices = @transform_0, window_bounds = array<i64: 2, 8, 14>}, {transform_indices = @transform_1, window_bounds = array<i64: 2, 4, 16>}, {pipeline_mode = #tpu.pipeline_mode<synchronous>, transform_indices = @transform_2, window_bounds = array<i64: 4, 24>}, {pipeline_mode = #tpu.pipeline_mode<synchronous>, transform_indices = @transform_3, window_bounds = array<i64: 4, 24>}, {pipeline_mode = #tpu.pipeline_mode<synchronous>, transform_indices = @transform_4, window_bounds = array<i64: 4, 1>}, {pipeline_mode = #tpu.pipeline_mode<synchronous>, transform_indices = @transform_5, window_bounds = array<i64: 4, 1>}, {transform_indices = @transform_6, window_bounds = array<i64: 4, 32>}]} {
    %cst = arith.constant 0.000000e+00 : bf16
    %0 = vector.broadcast %cst : bf16 to vector<8x32xbf16>
    %c0 = arith.constant 0 : index
    %c0_0 = arith.constant 0 : index
    %1 = vector.load %arg8[%c0, %c0_0] : memref<8x32xbf16, #tpu.memory_space<vmem>>, vector<8x32xbf16>
    tpu.vector_store %arg8[%c0, %c0_0], %0 {strides = array<i32>} : memref<8x32xbf16, #tpu.memory_space<vmem>>, vector<8x32xbf16>,
    %cst_1 = arith.constant 0.000000e+00 : bf16
    %2 = vector.broadcast %cst_1 : bf16 to vector<8x36xbf16>
    %c0_2 = arith.constant 0 : index
    %c0_3 = arith.constant 0 : index
    %3 = vector.load %arg9[%c0_2, %c0_3] : memref<8x36xbf16, #tpu.memory_space<vmem>>, vector<8x36xbf16>
    tpu.vector_store %arg9[%c0_2, %c0_3], %2 {strides = array<i32>} : memref<8x36xbf16, #tpu.memory_space<vmem>>, vector<8x36xbf16>,
    %c0_4 = arith.constant 0 : index
    %c0_5 = arith.constant 0 : index
    %c0_6 = arith.constant 0 : index
    %4 = vector.load %arg1[%c0_4, %c0_5, %c0_6] : memref<2x8x14xbf16, #tpu.memory_space<vmem>>, vector<1x8x14xbf16>
    %5 = vector.shape_cast %4 : vector<1x8x14xbf16> to vector<8x14xbf16>
    %c0_7 = arith.constant 0 : index
    %c1 = arith.constant 1 : index
    %6 = vector.load %arg8[%c0_7, %c1] : memref<8x32xbf16, #tpu.memory_space<vmem>>, vector<8x14xbf16>
    tpu.vector_store %arg8[%c0_7, %c1], %5 {strides = array<i32>} : memref<8x32xbf16, #tpu.memory_space<vmem>>, vector<8x14xbf16>,
    %c0_8 = arith.constant 0 : index
    %c0_9 = arith.constant 0 : index
    %c0_10 = arith.constant 0 : index
    %7 = vector.load %arg2[%c0_8, %c0_9, %c0_10] : memref<2x4x16xbf16, #tpu.memory_space<vmem>>, vector<1x4x16xbf16>
    %8 = vector.shape_cast %7 : vector<1x4x16xbf16> to vector<4x16xbf16>
    %c0_11 = arith.constant 0 : index
    %c1_12 = arith.constant 1 : index
    %9 = vector.load %arg9[%c0_11, %c1_12] : memref<8x36xbf16, #tpu.memory_space<vmem>>, vector<4x16xbf16>
    tpu.vector_store %arg9[%c0_11, %c1_12], %8 {strides = array<i32>} : memref<8x36xbf16, #tpu.memory_space<vmem>>, vector<4x16xbf16>,
    %c1_13 = arith.constant 1 : index
    %c0_14 = arith.constant 0 : index
    %c0_15 = arith.constant 0 : index
    %10 = vector.load %arg1[%c1_13, %c0_14, %c0_15] : memref<2x8x14xbf16, #tpu.memory_space<vmem>>, vector<1x8x14xbf16>
    %11 = vector.shape_cast %10 : vector<1x8x14xbf16> to vector<8x14xbf16>
    %c0_16 = arith.constant 0 : index
    %c17 = arith.constant 17 : index
    %12 = vector.load %arg8[%c0_16, %c17] : memref<8x32xbf16, #tpu.memory_space<vmem>>, vector<8x14xbf16>
    tpu.vector_store %arg8[%c0_16, %c17], %11 {strides = array<i32>} : memref<8x32xbf16, #tpu.memory_space<vmem>>, vector<8x14xbf16>,
    %c1_17 = arith.constant 1 : index
    %c0_18 = arith.constant 0 : index
    %c0_19 = arith.constant 0 : index
    %13 = vector.load %arg2[%c1_17, %c0_18, %c0_19] : memref<2x4x16xbf16, #tpu.memory_space<vmem>>, vector<1x4x16xbf16>
    %14 = vector.shape_cast %13 : vector<1x4x16xbf16> to vector<4x16xbf16>
    %c0_20 = arith.constant 0 : index
    %c19 = arith.constant 19 : index
    %15 = vector.load %arg9[%c0_20, %c19] : memref<8x36xbf16, #tpu.memory_space<vmem>>, vector<4x16xbf16>
    tpu.vector_store %arg9[%c0_20, %c19], %14 {strides = array<i32>} : memref<8x36xbf16, #tpu.memory_space<vmem>>, vector<4x16xbf16>,
    %c0_21 = arith.constant 0 : index
    %c0_22 = arith.constant 0 : index
    %16 = vector.load %arg8[%c0_21, %c0_22] : memref<8x32xbf16, #tpu.memory_space<vmem>>, vector<8x32xbf16>
    %c0_23 = arith.constant 0 : index
    %c0_24 = arith.constant 0 : index
    %17 = vector.load %arg3[%c0_23, %c0_24] : memref<4x24xbf16, #tpu.memory_space<vmem>>, vector<4x24xbf16>
    %18 = vector.extract_strided_slice %16 {offsets = [0, 0], sizes = [8, 30], strides = [1, 1]} : vector<8x32xbf16> to vector<8x30xbf16>
    %19 = vector.extract_strided_slice %16 {offsets = [0, 1], sizes = [8, 30], strides = [1, 1]} : vector<8x32xbf16> to vector<8x30xbf16>
    %20 = vector.extract_strided_slice %16 {offsets = [0, 2], sizes = [8, 30], strides = [1, 1]} : vector<8x32xbf16> to vector<8x30xbf16>
    %21 = tpu.concatenate %18, %19, %20 in 0 : vector<8x30xbf16>, vector<8x30xbf16>, vector<8x30xbf16> -> vector<24x30xbf16>
    %cst_25 = arith.constant dense<0.000000e+00> : vector<4x30xf32>
    %22 = tpu.matmul %17, %21, %cst_25 {dimension_numbers = #tpu.dot_dimension_numbers<[1], [0], [0], [1], [0, 0, 1, 1], [], []>} : vector<4x24xbf16>, vector<24x30xbf16>, vector<4x30xf32> -> vector<4x30xf32>
    %c0_26 = arith.constant 0 : index
    %c0_27 = arith.constant 0 : index
    %23 = vector.load %arg5[%c0_26, %c0_27] : memref<4x1xf32, #tpu.memory_space<vmem>>, vector<4x1xf32>
    %24 = vector.broadcast %23 : vector<4x1xf32> to vector<4x30xf32>
    %25 = arith.addf %22, %24 : vector<4x30xf32>
    %cst_28 = arith.constant 0.000000e+00 : f32
    %26 = vector.broadcast %cst_28 : f32 to vector<4x30xf32>
    %27 = arith.maximumf %25, %26 : vector<4x30xf32>
    %28 = arith.truncf %27 : vector<4x30xf32> to vector<4x30xbf16>
    %29 = vector.extract_strided_slice %28 {offsets = [0, 0], sizes = [4, 14], strides = [1, 1]} : vector<4x30xbf16> to vector<4x14xbf16>
    %c4 = arith.constant 4 : index
    %c2 = arith.constant 2 : index
    %30 = vector.load %arg9[%c4, %c2] : memref<8x36xbf16, #tpu.memory_space<vmem>>, vector<4x14xbf16>
    tpu.vector_store %arg9[%c4, %c2], %29 {strides = array<i32>} : memref<8x36xbf16, #tpu.memory_space<vmem>>, vector<4x14xbf16>,
    %31 = vector.extract_strided_slice %28 {offsets = [0, 16], sizes = [4, 14], strides = [1, 1]} : vector<4x30xbf16> to vector<4x14xbf16>
    %c4_29 = arith.constant 4 : index
    %c20 = arith.constant 20 : index
    %32 = vector.load %arg9[%c4_29, %c20] : memref<8x36xbf16, #tpu.memory_space<vmem>>, vector<4x14xbf16>
    tpu.vector_store %arg9[%c4_29, %c20], %31 {strides = array<i32>} : memref<8x36xbf16, #tpu.memory_space<vmem>>, vector<4x14xbf16>,
    %c0_30 = arith.constant 0 : index
    %c0_31 = arith.constant 0 : index
    %33 = vector.load %arg9[%c0_30, %c0_31] : memref<8x36xbf16, #tpu.memory_space<vmem>>, vector<8x36xbf16>
    %c0_32 = arith.constant 0 : index
    %c0_33 = arith.constant 0 : index
    %34 = vector.load %arg4[%c0_32, %c0_33] : memref<4x24xbf16, #tpu.memory_space<vmem>>, vector<4x24xbf16>
    %35 = vector.extract_strided_slice %33 {offsets = [0, 0], sizes = [8, 34], strides = [1, 1]} : vector<8x36xbf16> to vector<8x34xbf16>
    %36 = vector.extract_strided_slice %33 {offsets = [0, 1], sizes = [8, 34], strides = [1, 1]} : vector<8x36xbf16> to vector<8x34xbf16>
    %37 = vector.extract_strided_slice %33 {offsets = [0, 2], sizes = [8, 34], strides = [1, 1]} : vector<8x36xbf16> to vector<8x34xbf16>
    %38 = tpu.concatenate %35, %36, %37 in 0 : vector<8x34xbf16>, vector<8x34xbf16>, vector<8x34xbf16> -> vector<24x34xbf16>
    %cst_34 = arith.constant dense<0.000000e+00> : vector<4x34xf32>
    %39 = tpu.matmul %34, %38, %cst_34 {dimension_numbers = #tpu.dot_dimension_numbers<[1], [0], [0], [1], [0, 0, 1, 1], [], []>} : vector<4x24xbf16>, vector<24x34xbf16>, vector<4x34xf32> -> vector<4x34xf32>
    %c0_35 = arith.constant 0 : index
    %c0_36 = arith.constant 0 : index
    %40 = vector.load %arg6[%c0_35, %c0_36] : memref<4x1xf32, #tpu.memory_space<vmem>>, vector<4x1xf32>
    %41 = vector.broadcast %40 : vector<4x1xf32> to vector<4x34xf32>
    %42 = arith.addf %39, %41 : vector<4x34xf32>
    %cst_37 = arith.constant 0.000000e+00 : f32
    %43 = vector.broadcast %cst_37 : f32 to vector<4x34xf32>
    %44 = arith.maximumf %42, %43 : vector<4x34xf32>
    %45 = vector.extract_strided_slice %44 {offsets = [0, 0], sizes = [4, 16], strides = [1, 1]} : vector<4x34xf32> to vector<4x16xf32>
    %46 = vector.extract_strided_slice %44 {offsets = [0, 18], sizes = [4, 16], strides = [1, 1]} : vector<4x34xf32> to vector<4x16xf32>
    %47 = tpu.concatenate %45, %46 in 1 : vector<4x16xf32>, vector<4x16xf32> -> vector<4x32xf32>
    %c0_38 = arith.constant 0 : index
    %c0_39 = arith.constant 0 : index
    %48 = vector.load %arg7[%c0_38, %c0_39] : memref<4x32xf32, #tpu.memory_space<vmem>>, vector<4x32xf32>
    tpu.vector_store %arg7[%c0_38, %c0_39], %47 {strides = array<i32>} : memref<4x32xf32, #tpu.memory_space<vmem>>, vector<4x32xf32>,
    return
  }
  func.func @transform_0(%arg0: i32) -> (i32, i32, i32) {
    %c0_i32 = arith.constant 0 : i32
    %c0_i32_0 = arith.constant 0 : i32
    %c0_i32_1 = arith.constant 0 : i32
    return %arg0, %c0_i32, %c0_i32_0 : i32, i32, i32
  }
  func.func @transform_1(%arg0: i32) -> (i32, i32, i32) {
    %c0_i32 = arith.constant 0 : i32
    %c0_i32_0 = arith.constant 0 : i32
    %c0_i32_1 = arith.constant 0 : i32
    return %arg0, %c0_i32, %c0_i32_0 : i32, i32, i32
  }
  func.func @transform_2(%arg0: i32) -> (i32, i32) {
    %c0_i32 = arith.constant 0 : i32
    %c0_i32_0 = arith.constant 0 : i32
    %c0_i32_1 = arith.constant 0 : i32
    return %c0_i32, %c0_i32_0 : i32, i32
  }
  func.func @transform_3(%arg0: i32) -> (i32, i32) {
    %c0_i32 = arith.constant 0 : i32
    %c0_i32_0 = arith.constant 0 : i32
    %c0_i32_1 = arith.constant 0 : i32
    return %c0_i32, %c0_i32_0 : i32, i32
  }
  func.func @transform_4(%arg0: i32) -> (i32, i32) {
    %c0_i32 = arith.constant 0 : i32
    %c0_i32_0 = arith.constant 0 : i32
    %c0_i32_1 = arith.constant 0 : i32
    return %c0_i32, %c0_i32_0 : i32, i32
  }
  func.func @transform_5(%arg0: i32) -> (i32, i32) {
    %c0_i32 = arith.constant 0 : i32
    %c0_i32_0 = arith.constant 0 : i32
    %c0_i32_1 = arith.constant 0 : i32
    return %c0_i32, %c0_i32_0 : i32, i32
  }
  func.func @transform_6(%arg0: i32) -> (i32, i32) {
    %c0_i32 = arith.constant 0 : i32
    %c0_i32_0 = arith.constant 0 : i32
    return %c0_i32, %arg0 : i32, i32
  }
}

</mosaic_0001>

<llo_original>
// kernel: tpu_custom_call.1
$region0: #{tpu_custom_call.1}
  #allocation0 [shape = 'u32[]', space=smem, size = 0x4, offset = 0x4, fixed_abs, tag = 'smem constant byte address 0x4 - core index']
  #allocation1 [shape = 'u32[144,128]{1,0:T(1,128)}', space=vmem, size = 0x12000, scoped, tag = 'internal scratch']
  #allocation2 [shape = 'bf16[8,32]{1,0:T(8,128)(2,1)}', space=vmem, size = 0x800, scoped, tag = 'scratch operand']
  #allocation3 [shape = 'bf16[8,36]{1,0:T(8,128)(2,1)}', space=vmem, size = 0x800, scoped, tag = 'scratch operand']
  %s0 = inlined_call_operand.vmem [shape: bf16[2,8,14], index: 0, kind: input, shape index: {}]
  %s1 = inlined_call_operand.vmem [shape: bf16[2,4,16], index: 1, kind: input, shape index: {}]
  %s2 = inlined_call_operand.vmem [shape: bf16[4,24], index: 2, kind: input, shape index: {}]
  %s3 = inlined_call_operand.vmem [shape: bf16[4,24], index: 3, kind: input, shape index: {}]
  %s4 = inlined_call_operand.vmem [shape: f32[4,1], index: 4, kind: input, shape index: {}]
  %s5 = inlined_call_operand.vmem [shape: f32[4,1], index: 5, kind: input, shape index: {}]
  %s6 = inlined_call_operand.hbm [shape: f32[4,32], index: 6, kind: output, shape index: {}]
  %s7 = sld [smem:[#allocation0]]
  $region34: #{tpu_custom_call.1} parent=0
    _
  %s9 = ssub.s32 1, %s7
  %s10 = scalar_select 0, %s9, %s7
  $region1: #{tpu_custom_call.1} parent=0
    #allocation4 [shape = 'u8[2048]{0}', space=vmem, size = 0x800, scoped, tag = 'output window, operand 0, single buffered']
    #allocation5 [shape = 's32[1]{0}', space=sflag, size = 0x4, scoped, tag = 'scoped memory for tpu_custom_call.1']
    %11 = vsyncpa [#allocation5], 0
    // Predicated region
    $region2: #{tpu_custom_call.1} parent=1 // pred_check
      _
    $region3: #{tpu_custom_call.1} parent=1 // pred_check_branch
      %13 = sbr.rel (0) target = $region5
    $region4: #{tpu_custom_call.1} parent=1 // pred_region
      _
    $region5: #{tpu_custom_call.1} parent=1 // pred_fallthru
      _
    // Predicated region
    $region6: #{tpu_custom_call.1} parent=1 // pred_check
      _
    $region7: #{tpu_custom_call.1} parent=1 // pred_check_branch
      %15 = sbr.rel (0) target = $region9
    $region8: #{tpu_custom_call.1} parent=1 // pred_region
      _
    $region9: #{tpu_custom_call.1} parent=1 // pred_fallthru
      _
    // Predicated region
    $region10: #{tpu_custom_call.1} parent=1 // pred_check
      _
    $region11: #{tpu_custom_call.1} parent=1 // pred_check_branch
      %17 = sbr.rel (0) target = $region13
    $region12: #{tpu_custom_call.1} parent=1 // pred_region
      _
    $region13: #{tpu_custom_call.1} parent=1 // pred_fallthru
      _
    // Predicated region
    $region14: #{tpu_custom_call.1} parent=1 // pred_check
      _
    $region15: #{tpu_custom_call.1} parent=1 // pred_check_branch
      %19 = sbr.rel (0) target = $region17
    $region16: #{tpu_custom_call.1} parent=1 // pred_region
      _
    $region17: #{tpu_custom_call.1} parent=1 // pred_fallthru
      _
    // Predicated region
    $region18: #{tpu_custom_call.1} parent=1 // pred_check
      _
    $region19: #{tpu_custom_call.1} parent=1 // pred_check_branch
      %21 = sbr.rel (0) target = $region21
    $region20: #{tpu_custom_call.1} parent=1 // pred_region
      _
    $region21: #{tpu_custom_call.1} parent=1 // pred_fallthru
      _
    // Predicated region
    $region22: #{tpu_custom_call.1} parent=1 // pred_check
      _
    $region23: #{tpu_custom_call.1} parent=1 // pred_check_branch
      %23 = sbr.rel (0) target = $region25
    $region24: #{tpu_custom_call.1} parent=1 // pred_region
      _
    $region25: #{tpu_custom_call.1} parent=1 // pred_fallthru
      _
    %vm25 = vcmask 257024
    %26 = vst.msk [vmem:[#allocation2] sm:$0xf] %vm25, 0
    %vm27 = vcmask 289792
    %28 = vst.msk [vmem:[#allocation3] sm:$0xf] %vm27, 0
    %v29 = vld [vmem:[%s0] sm:$0xf]
    %31 = vrot.lane.b32.xlu0 %v29, 1
    %v32 = vpop.permute.xlu0 %31
    %vm34 = vcmask 117768
    %35 = vst.msk [vmem:[#allocation2] sm:$0xf] %vm34, %v32
    %v36 = vld [vmem:[%s1] sm:$0x3]
    %v39 = vunpack.c.l.s4 1983009808
    %v40 = vunpack.c.0.s8 %v39
    %v41 = vlaneseq
    %v42 = vshrl.u32 %v41, 7
    %v43 = vsub.s32 %v40, %v42
    %v44 = vrot.slane %v36, %v43
    %45 = vrot.lane.b32.xlu0 %v44, 1
    %v46 = vpop.permute.xlu0 %45
    %vm48 = vcmask 132104
    %49 = vst.msk [vmem:[#allocation3] sm:$0x3] %vm48, %v46
    %s50 = scalar_lea.vmem %s0, 4
    %v51 = vld [vmem:[%s50] sm:$0xf]
    %53 = vrot.lane.b32.xlu0 %v51, 17
    %v54 = vpop.permute.xlu0 %53
    %vm56 = vcmask 248968
    %57 = vst.msk [vmem:[#allocation2] sm:$0xf] %vm56, %v54
    %s58 = scalar_lea.vmem %s1, 2
    %v59 = vld [vmem:[%s58] sm:$0x3]
    %v62 = vunpack.c.l.s4 1983009808
    %v63 = vunpack.c.0.s8 %v62
    %v64 = vlaneseq
    %v65 = vshrl.u32 %v64, 7
    %v66 = vsub.s32 %v63, %v65
    %v67 = vrot.slane %v59, %v66
    %68 = vrot.lane.b32.xlu0 %v67, 19
    %v69 = vpop.permute.xlu0 %68
    %vm71 = vcmask 279704
    %72 = vst.msk [vmem:[#allocation3] sm:$0x3] %vm71, %v69
    %v73 = vld [vmem:[#allocation2] sm:$0xf]
    %v74 = vld [vmem:[%s2] sm:$0x3]
    %v76 = vunpack.c.l.b16 %v73
    %v77 = vpack.c.b16 %v76, %v76
    %78 = vrot.lane.b32.xlu0 %v77, 127
    %v79 = vpop.permute.xlu0 %78
    %80 = vrot.lane.b32.xlu0 %v77, 126
    %v81 = vpop.permute.xlu0 %80
    %vm82 = vcmask 1043456
    %v85 = vsel %vm82, %v73, %v79
    %v87 = vld [vmem:[%s4] sm:$0xf]
    %89 = vset.pattern.permute.xlu0 0
    %90 = vperm.xlu0 %89, %v87
    %v91 = vpop.permute.xlu0 %90
    %vm93 = vcmask 195584
    %v95 = vsel %vm93, %v74, 0
    %v98 = vsel %vm82, %v81, 0
    %100 = vmatprep.subr.bf16.mxu0 0
    %101 = vmatpush1.bf16.msra.mxu0 %v85
    %102 = vmatprep.subr.bf16.mxu0 0
    %103 = vmatpush1.bf16.msra.mxu0 %v98
    %104 = vmatprep.subr.bf16.mxu0 0
    %105 = vmatpush1.bf16.msra.mxu0 0
    %106 = vmatprep.subr.bf16.mxu0 0
    %107 = vmatpush1.bf16.msra.mxu0 0
    %108 = vmatprep.subr.bf16.mxu0 0
    %109 = vmatpush1.bf16.msra.mxu0 0
    %110 = vmatprep.subr.bf16.mxu0 0
    %111 = vmatpush1.bf16.msra.mxu0 0
    %112 = vmatprep.subr.bf16.mxu0 0
    %113 = vmatpush1.bf16.msra.mxu0 0
    %114 = vmatprep.subr.bf16.mxu0 0
    %115 = vmatpush1.bf16.msra.mxu0 0
    %116 = vmatprep.subr.bf16.mxu0 0
    %117 = vmatpush1.bf16.msra.mxu0 0
    %118 = vmatprep.subr.bf16.mxu0 0
    %119 = vmatpush1.bf16.msra.mxu0 0
    %120 = vmatprep.subr.bf16.mxu0 0
    %121 = vmatpush1.bf16.msra.mxu0 0
    %122 = vmatprep.subr.bf16.mxu0 0
    %123 = vmatpush1.bf16.msra.mxu0 0
    %124 = vmatprep.subr.bf16.mxu0 0
    %125 = vmatpush1.bf16.msra.mxu0 0
    %126 = vmatprep.subr.bf16.mxu0 0
    %127 = vmatpush1.bf16.msra.mxu0 0
    %128 = vmatprep.subr.bf16.mxu0 0
    %129 = vmatpush1.bf16.msra.mxu0 0
    %130 = vmatprep.subr.bf16.mxu0 0
    %131 = vmatpush1.bf16.msra.mxu0 0
    %132 = vmatprep.mubr.bf16.mxu0 0
    %133 = vmatmul.mubr.bf16.gmra.mrb[0].mxu0 %v95
    %v134 = vpop.f32.mrb[0].mxu0
    %v135 = vadd.f32 %v91, %v134
    %v136 = vpop.f32.mrb[0].mxu0
    %v137 = vpop.f32.mrb[0].mxu0
    %v138 = vpop.f32.mrb[0].mxu0
    %139 = vdwg.mxu0
    %v140 = vmax.f32 %v135, 0.0
    %v141 = vpack.c.bf16 %v140, %v140
    %v143 = vunpack.c.l.b16 %v141
    %v144 = vpack.c.b16 %v143, %v143
    %v145 = vrot.slane %v144, 6
    %146 = vrot.lane.b32.xlu0 %v145, 2
    %v147 = vpop.permute.xlu0 %146
    %vm149 = vcmask 125970
    %150 = vst.msk [vmem:[#allocation3] sm:$0xc] %vm149, %v147
    %151 = vrot.lane.b32.xlu0 %v145, 4
    %v152 = vpop.permute.xlu0 %151
    %vm154 = vcmask 273570
    %155 = vst.msk [vmem:[#allocation3] sm:$0xc] %vm154, %v152
    %v156 = vld [vmem:[#allocation3] sm:$0xf]
    %v157 = vld [vmem:[%s3] sm:$0x3]
    %v159 = vunpack.c.l.b16 %v156
    %v160 = vpack.c.b16 %v159, %v159
    %161 = vrot.lane.b32.xlu0 %v160, 127
    %v162 = vpop.permute.xlu0 %161
    %163 = vrot.lane.b32.xlu0 %v160, 126
    %v164 = vpop.permute.xlu0 %163
    %v167 = vsel %vm82, %v156, %v162
    %v169 = vld [vmem:[%s5] sm:$0xf]
    %171 = vset.pattern.permute.xlu0 0
    %172 = vperm.xlu0 %171, %v169
    %v173 = vpop.permute.xlu0 %172
    %v176 = vsel %vm93, %v157, 0
    %v179 = vsel %vm82, %v164, 0
    %181 = vmatprep.subr.bf16.mxu0 0
    %182 = vmatpush1.bf16.msra.mxu0 %v167
    %183 = vmatprep.subr.bf16.mxu0 0
    %184 = vmatpush1.bf16.msra.mxu0 %v179
    %185 = vmatprep.subr.bf16.mxu0 0
    %186 = vmatpush1.bf16.msra.mxu0 0
    %187 = vmatprep.subr.bf16.mxu0 0
    %188 = vmatpush1.bf16.msra.mxu0 0
    %189 = vmatprep.subr.bf16.mxu0 0
    %190 = vmatpush1.bf16.msra.mxu0 0
    %191 = vmatprep.subr.bf16.mxu0 0
    %192 = vmatpush1.bf16.msra.mxu0 0
    %193 = vmatprep.subr.bf16.mxu0 0
    %194 = vmatpush1.bf16.msra.mxu0 0
    %195 = vmatprep.subr.bf16.mxu0 0
    %196 = vmatpush1.bf16.msra.mxu0 0
    %197 = vmatprep.subr.bf16.mxu0 0
    %198 = vmatpush1.bf16.msra.mxu0 0
    %199 = vmatprep.subr.bf16.mxu0 0
    %200 = vmatpush1.bf16.msra.mxu0 0
    %201 = vmatprep.subr.bf16.mxu0 0
    %202 = vmatpush1.bf16.msra.mxu0 0
    %203 = vmatprep.subr.bf16.mxu0 0
    %204 = vmatpush1.bf16.msra.mxu0 0
    %205 = vmatprep.subr.bf16.mxu0 0
    %206 = vmatpush1.bf16.msra.mxu0 0
    %207 = vmatprep.subr.bf16.mxu0 0
    %208 = vmatpush1.bf16.msra.mxu0 0
    %209 = vmatprep.subr.bf16.mxu0 0
    %210 = vmatpush1.bf16.msra.mxu0 0
    %211 = vmatprep.subr.bf16.mxu0 0
    %212 = vmatpush1.bf16.msra.mxu0 0
    %213 = vmatprep.mubr.bf16.mxu0 0
    %214 = vmatmul.mubr.bf16.gmra.mrb[0].mxu0 %v176
    %v215 = vpop.f32.mrb[0].mxu0
    %v216 = vadd.f32 %v173, %v215
    %v217 = vpop.f32.mrb[0].mxu0
    %v218 = vpop.f32.mrb[0].mxu0
    %v219 = vpop.f32.mrb[0].mxu0
    %220 = vdwg.mxu0
    %v221 = vmax.f32 %v216, 0.0
    %223 = vrot.lane.b32.xlu0 %v221, 126
    %v224 = vpop.permute.xlu0 %223
    %vm226 = vcmask 130048
    %v227 = vsel %vm226, %v221, %v224
    %228 = vst.msk [vmem:[#allocation4] sm:$0xf] %vm25, %v227
    // Predicated region
    $region26: #{tpu_custom_call.1} parent=1 // pred_check
      _
    $region27: #{tpu_custom_call.1} parent=1 // pred_check_branch
      %230 = sbr.rel (0) target = $region29
    $region28: #{tpu_custom_call.1} parent=1 // pred_region
      %s232 = ssub.s32 64, 64
      %233 = vsyncadd [#allocation5], %s232
      %s235 = sshll.u32 [#allocation4], 4
      %s236 = int_to_ptr.vmem [resolvable:$true] %s235
      %238 = dma.vmem_to_hbm [thread:$0]  %s236, 64, %s6, [#allocation5]
    $region29: #{tpu_custom_call.1} parent=1 // pred_fallthru
      _
    // Predicated region
    $region30: #{tpu_custom_call.1} parent=1 // pred_check
      _
    $region31: #{tpu_custom_call.1} parent=1 // pred_check_branch
      %240 = sbr.rel (0) target = $region33
    $region32: #{tpu_custom_call.1} parent=1 // pred_region
      %241 = dma.done [#allocation5], 64
    $region33: #{tpu_custom_call.1} parent=1 // pred_fallthru
      _
    %242 = vsyncpa [#allocation5], 1

</llo_original>
